<compile_context>
chip_gen: v5e
topology: v5e:2x2
jax: 0.10.0
libtpu: 0.0.40
codegen_flags: <defaults>
</compile_context>

<pallas_src>
import functools

import jax
import jax.numpy as jnp
from jax.experimental import pallas as pl
from jax.experimental.pallas import tpu as pltpu

LRELU_SLOPE = 0.1
COMPUTE_DTYPE = jnp.bfloat16  # matmul-operand / hidden-activation dtype (f32 accum)


def _round_up(x, m):
    return (x + m - 1) // m * m


# ---------------------------------------------------------------------------
# Pallas kernel: gpb groups of a grouped Conv1d on one (batch, time-tile),
# with taps + stride-phases folded into the MXU contraction dimension.
# ---------------------------------------------------------------------------
def _conv_kernel(w_ref, x_ref, h_ref, b_ref, o_ref, win_ref, stk_ref, *,
                 s, Q, cin_g, gpb, lt, slope):
    # w_ref:   (gpb, cout_g, s*Q*cin_g)   bf16  (VMEM-resident across batch/time)
    # x_ref:   (1, gpb, s*cin_g, lt)      bf16  polyphase main block (lane aligned)
    # h_ref:   (1, gpb, s*cin_g, 128)     bf16  halo = head of the next block
    # b_ref:   (gpb, cout_g, 1)           f32
    # o_ref:   (1, gpb, cout_g, lt)       out dtype, lane-dense stores
    # win_ref: (gpb, s*cin_g, lt+128)     VMEM scratch: main ++ halo window
    # stk_ref: (s*Q*cin_g, lt)            VMEM scratch: tap-stacked matmul RHS
    win_ref[:, :, :lt] = x_ref[0]
    win_ref[:, :, lt:] = h_ref[0]
    for gg in range(gpb):
        # Build the tap-stacked RHS: row (r*Q + q)*cin_g + c  <-  phase r,
        # channel c, shifted by q lanes.
        for r in range(s):
            row0 = r * Q * cin_g
            src0 = r * cin_g
            for q in range(Q):
                stk_ref[row0 + q * cin_g: row0 + (q + 1) * cin_g, :] = (
                    win_ref[gg, src0:src0 + cin_g, q:q + lt])
        # Single wide-contraction matmul per group (f32 MXU accumulation).
        acc = jnp.dot(w_ref[gg], stk_ref[...],
                      preferred_element_type=jnp.float32)
        acc = acc + b_ref[gg]
        if slope is not None:
            acc = jnp.where(acc >= 0, acc, acc * slope)
        o_ref[0, gg] = acc.astype(o_ref.dtype)


@functools.partial(
    jax.jit,
    static_argnames=("stride", "padding", "groups", "lrelu_slope", "out_dtype"),
)
def conv1d_pallas(x, w, b, *, stride, padding, groups, lrelu_slope=None,
                  out_dtype=None):
    """Grouped Conv1d with optional fused LeakyReLU.

    x: (B, Cin, L)   w: (Cout, Cin//groups, K)   b: (Cout,)
    Returns (B, Cout, Lout) with Lout = (L + 2*padding - K)//stride + 1.
    """
    B, Cin, L = x.shape
    Cout, cin_g, K = w.shape
    assert Cin == cin_g * groups and Cout % groups == 0
    s = stride
    cout_g = Cout // groups
    lout = (L + 2 * padding - K) // s + 1
    assert lout >= 1
    Q = -(-K // s)                       # taps per phase
    assert Q - 1 <= 128                  # halo fits in one 128-lane block
    sqc = s * Q * cin_g                  # folded contraction width
    out_dtype = x.dtype if out_dtype is None else out_dtype

    # ---- time tile (lane axis): bounded by a VMEM heuristic on the stack size
    if sqc <= 1024:
        cap = 2048
    elif sqc <= 3072:
        cap = 1024
    else:
        cap = 512
    lt = min(cap, _round_up(lout, 128))
    nt = -(-lout // lt)
    lph = (nt + 1) * lt                  # per-phase padded length (halo + align)
    hb = lt // 128                       # halo block-index multiplier

    # ---- dense (groups==1) wide layers: pseudo-group over Cout tiles of 512
    COUT_TILE = 512
    pseudo = (groups == 1 and cout_g > COUT_TILE and cout_g % COUT_TILE == 0)
    if pseudo:
        G_eff, cout_eff, gpb = Cout // COUT_TILE, COUT_TILE, 1
    else:
        G_eff, cout_eff = groups, cout_g
        gpb = 1
        for cand in range(min(groups, max(1, 128 // cout_g)), 0, -1):
            if groups % cand == 0:
                gpb = cand
                break

    # ---- weights: fold taps & phases into the contraction (lane) dim ----
    wr = w.reshape(groups, cout_g, cin_g, K)
    wp = jnp.pad(wr, ((0, 0), (0, 0), (0, 0), (0, s * Q - K)))
    wf = wp.reshape(groups, cout_g, cin_g, Q, s).transpose(0, 1, 4, 3, 2)
    wf = wf.reshape(G_eff, cout_eff, sqc).astype(COMPUTE_DTYPE)
    b2 = b.astype(jnp.float32).reshape(G_eff, cout_eff, 1)

    # ---- input: zero-pad + polyphase decompose in bf16 (single XLA pass) ----
    rpad = s * lph - L - padding
    assert rpad >= 0
    xpad = jnp.pad(x.astype(COMPUTE_DTYPE),
                   ((0, 0), (0, 0), (padding, rpad)))
    ph = xpad.reshape(B, groups, cin_g, lph, s).transpose(0, 1, 4, 2, 3)
    ph = ph.reshape(B, groups, s * cin_g, lph)

    if pseudo:
        x_map = lambda g, bb, j: (bb, 0, 0, j)
        h_map = lambda g, bb, j: (bb, 0, 0, (j + 1) * hb)
    else:
        x_map = lambda g, bb, j: (bb, g, 0, j)
        h_map = lambda g, bb, j: (bb, g, 0, (j + 1) * hb)

    kernel = functools.partial(_conv_kernel, s=s, Q=Q, cin_g=cin_g, gpb=gpb,
                               lt=lt, slope=lrelu_slope)

    out = pl.pallas_call(
        kernel,
        out_shape=jax.ShapeDtypeStruct((B, G_eff, cout_eff, nt * lt), out_dtype),
        grid=(G_eff // gpb, B, nt),      # groups outermost -> weights stay resident
        in_specs=[
            pl.BlockSpec((gpb, cout_eff, sqc), lambda g, bb, j: (g, 0, 0)),
            pl.BlockSpec((1, gpb, s * cin_g, lt), x_map),
            pl.BlockSpec((1, gpb, s * cin_g, 128), h_map),
            pl.BlockSpec((gpb, cout_eff, 1), lambda g, bb, j: (g, 0, 0)),
        ],
        out_specs=pl.BlockSpec((1, gpb, cout_eff, lt),
                               lambda g, bb, j: (bb, g, 0, j)),
        scratch_shapes=[
            pltpu.VMEM((gpb, s * cin_g, lt + 128), COMPUTE_DTYPE),
            pltpu.VMEM((sqc, lt), COMPUTE_DTYPE),
        ],
        compiler_params=pltpu.CompilerParams(
            dimension_semantics=("parallel", "parallel", "parallel"),
            vmem_limit_bytes=40 * 1024 * 1024,
        ),
    )(wf, ph, ph, b2)

    return out.reshape(B, Cout, nt * lt)[:, :, :lout]


# ---------------------------------------------------------------------------
# AvgPool1d(kernel=4, stride=2, padding=2), count_include_pad=True — VPU kernel
# (time-tiled, lane-dense output stores; phases prepared in XLA glue)
# ---------------------------------------------------------------------------
def _avgpool_kernel(p_ref, o_ref, *, lt):
    # p_ref: (R, 2, lph)  even/odd phases of the zero-padded signal (resident)
    # o_ref: (R, lt)      lane-dense output tile
    j = pl.program_id(0)
    base = pl.multiple_of(j * lt, 128)
    a0 = p_ref[:, 0, pl.ds(base, lt)]
    a1 = p_ref[:, 1, pl.ds(base, lt)]
    b0 = p_ref[:, 0, pl.ds(base + 1, lt)]
    b1 = p_ref[:, 1, pl.ds(base + 1, lt)]
    o_ref[...] = (0.25 * (a0 + a1 + b0 + b1)).astype(o_ref.dtype)


@jax.jit
def avg_pool1d_pallas(x):
    """AvgPool1d(4, 2, padding=2) (PyTorch default count_include_pad=True)."""
    B, C, L = x.shape
    lout = L // 2 + 1
    R = B * C
    lt = min(_round_up(lout, 128), 2048)
    nt = -(-lout // lt)
    lph = nt * lt + 128
    xpad = jnp.pad(x.reshape(R, L), ((0, 0), (2, 2 * lph - L - 2)))
    ph = xpad.reshape(R, lph, 2).transpose(0, 2, 1)        # (R, 2, lph)

    out = pl.pallas_call(
        functools.partial(_avgpool_kernel, lt=lt),
        out_shape=jax.ShapeDtypeStruct((R, nt * lt), x.dtype),
        grid=(nt,),
        in_specs=[pl.BlockSpec((R, 2, lph), lambda j: (0, 0, 0))],
        out_specs=pl.BlockSpec((R, lt), lambda j: (0, j)),
        compiler_params=pltpu.CompilerParams(
            dimension_semantics=("parallel",)),
    )(ph)
    return out[:, :lout].reshape(B, C, lout)


# ---------------------------------------------------------------------------
# DiscriminatorS / MultiScaleDiscriminator
# ---------------------------------------------------------------------------
_CONV_CFGS = [
    # (cin, cout, kernel, stride, groups, padding)
    (1, 128, 15, 1, 1, 7),
    (128, 128, 41, 2, 4, 20),
    (128, 256, 41, 2, 16, 20),
    (256, 512, 41, 4, 16, 20),
    (512, 1024, 41, 4, 16, 20),
    (1024, 1024, 41, 1, 16, 20),
    (1024, 1024, 5, 1, 1, 2),
]
_POST_CFG = (1024, 1, 3, 1, 1, 1)


def init_discriminator_s_params(key):
    # weight_norm / spectral_norm collapse to effective weights at forward time.
    def _make(k, cin, cout, ksz, g):
        kw, kb = jax.random.split(k)
        fan_in = (cin // g) * ksz
        w = jax.random.normal(kw, (cout, cin // g, ksz), jnp.float32) / jnp.sqrt(fan_in)
        b = 0.01 * jax.random.normal(kb, (cout,), jnp.float32)
        return (w, b)

    convs = []
    for idx, (cin, cout, ksz, s, g, p) in enumerate(_CONV_CFGS):
        convs.append(_make(jax.random.fold_in(key, idx), cin, cout, ksz, g))
    cin, cout, ksz, s, g, p = _POST_CFG
    post = _make(jax.random.fold_in(key, 100), cin, cout, ksz, g)
    return {"convs": convs, "post": post}


def discriminator_s_forward(params, x):
    fmap = []
    for (w, b), (cin, cout, ksz, s, g, p) in zip(params["convs"], _CONV_CFGS):
        # hidden activations in bf16 (fed straight into the next conv's bf16 glue)
        x = conv1d_pallas(x, w, b, stride=s, padding=p, groups=g,
                          lrelu_slope=LRELU_SLOPE, out_dtype=COMPUTE_DTYPE)
        fmap.append(x)
    (w, b) = params["post"]
    cin, cout, ksz, s, g, p = _POST_CFG
    x = conv1d_pallas(x, w, b, stride=s, padding=p, groups=g,
                      lrelu_slope=None, out_dtype=jnp.float32)
    fmap.append(x)
    x_flat = x.reshape(x.shape[0], -1)   # torch.flatten(x, 1, -1)
    return x_flat, fmap


@jax.jit
def multi_scale_discriminator_forward(params_list, y, y_hat):
    B = y.shape[0]
    y_d_rs, y_d_gs, fmap_rs, fmap_gs = [], [], [], []
    # run y and y_hat through each discriminator as one concatenated batch
    x = jnp.concatenate([y, y_hat], axis=0)
    for i, params in enumerate(params_list):
        if i != 0:
            x = avg_pool1d_pallas(x)
        yd, fmap = discriminator_s_forward(params, x)
        y_d_rs.append(yd[:B])
        y_d_gs.append(yd[B:])
        fmap_rs.append([f[:B] for f in fmap])
        fmap_gs.append([f[B:] for f in fmap])
    return y_d_rs, y_d_gs, fmap_rs, fmap_gs


# ---------------------------------------------------------------------------
# Pure-JAX references (for in-script numerical self-checks)
# ---------------------------------------------------------------------------
def _conv1d_reference(x, w, b, *, stride, padding, groups, lrelu_slope=None):
    out = jax.lax.conv_general_dilated(
        x.astype(COMPUTE_DTYPE), w.astype(COMPUTE_DTYPE),
        window_strides=(stride,), padding=[(padding, padding)],
        dimension_numbers=("NCH", "OIH", "NCH"),
        feature_group_count=groups,
        preferred_element_type=jnp.float32)
    out = out + b[None, :, None].astype(jnp.float32)
    if lrelu_slope is not None:
        out = jnp.where(out >= 0, out, out * lrelu_slope)
    return out.astype(x.dtype)


if __name__ == "__main__":
    key = jax.random.PRNGKey(0)
    k_y, k_yh, k_p, k_t = jax.random.split(key, 4)

    # --- numerical self-checks of the conv kernel (stride patterns + dense path)
    check_cfgs = [(1, 128, 15, 1, 1, 7),        # cin_g == 1 (first layer)
                  (128, 256, 41, 2, 16, 20),    # grouped, stride 2
                  (256, 512, 41, 4, 16, 20),    # grouped, stride 4
                  (256, 1024, 5, 1, 1, 2)]      # dense, pseudo-grouped Cout
    for idx, (cin, cout, ksz, s, g, p) in enumerate(check_cfgs):
        kx, kw, kb = jax.random.split(jax.random.fold_in(k_t, idx), 3)
        xt = jax.random.normal(kx, (2, cin, 96), jnp.float32)
        wt = jax.random.normal(kw, (cout, cin // g, ksz), jnp.float32)
        wt = wt / jnp.sqrt((cin // g) * ksz)
        bt = 0.01 * jax.random.normal(kb, (cout,), jnp.float32)
        got = conv1d_pallas(xt, wt, bt, stride=s, padding=p, groups=g,
                            lrelu_slope=LRELU_SLOPE, out_dtype=jnp.float32)
        want = _conv1d_reference(xt, wt, bt, stride=s, padding=p, groups=g,
                                 lrelu_slope=LRELU_SLOPE)
        err = float(jnp.max(jnp.abs(got - want)))
        assert bool(jnp.allclose(got, want, rtol=2e-2, atol=2e-2)), (
            f"conv check {idx} failed, max abs err {err}")

    # avg-pool self-check
    kx = jax.random.fold_in(k_t, 99)
    xt = jax.random.normal(kx, (2, 1, 50), jnp.float32)
    got = avg_pool1d_pallas(xt)
    lo = got.shape[-1]
    xp = jnp.pad(xt, ((0, 0), (0, 0), (2, 2)))
    want = 0.25 * sum(xp[..., k:k + 2 * lo - 1:2] for k in range(4))
    assert bool(jnp.allclose(got, want, rtol=1e-5, atol=1e-5)), "avgpool check failed"

    # --- full MultiScaleDiscriminator forward at small synthetic shapes ---
    B, T = 2, 128
    y = jax.random.normal(k_y, (B, 1, T), jnp.float32)
    y_hat = jax.random.normal(k_yh, (B, 1, T), jnp.float32)
    params_list = [
        init_discriminator_s_params(jax.random.fold_in(k_p, i)) for i in range(3)
    ]

    outs = multi_scale_discriminator_forward(params_list, y, y_hat)
    jax.block_until_ready(outs)

    y_d_rs, y_d_gs, fmap_rs, fmap_gs = outs
    assert len(y_d_rs) == 3 and len(y_d_gs) == 3
    assert all(len(f) == 8 for f in fmap_rs) and all(len(f) == 8 for f in fmap_gs)
    assert all(f.shape[0] == B for fl in fmap_rs for f in fl)
    assert y_d_rs[0].shape == (B, fmap_rs[0][-1].shape[-1])

    print("KERNEL_OK")
</pallas_src>

<mosaic_0001>
module attributes {stable_mosaic.version = 11 : i64} {
  func.func @_conv_kernel(%arg0: i32, %arg1: i32, %arg2: i32, %arg3: memref<1x128x15xbf16, #tpu.memory_space<vmem>>, %arg4: memref<1x1x1x128xbf16, #tpu.memory_space<vmem>>, %arg5: memref<1x1x1x128xbf16, #tpu.memory_space<vmem>>, %arg6: memref<1x128x1xf32, #tpu.memory_space<vmem>>, %arg7: memref<1x1x128x128xf32, #tpu.memory_space<vmem>>, %arg8: memref<1x1x256xbf16, #tpu.memory_space<vmem>>, %arg9: memref<15x128xbf16, #tpu.memory_space<vmem>>) attributes {dimension_semantics = [#tpu.dimension_semantics<parallel>, #tpu.dimension_semantics<parallel>, #tpu.dimension_semantics<parallel>], iteration_bounds = array<i64: 1, 2, 1>, scalar_prefetch = 0 : i64, scratch_operands = 2 : i64, tpu.core_type = #tpu.core_type<tc>, window_params = [{transform_indices = @transform_0, window_bounds = array<i64: 1, 128, 15>}, {transform_indices = @transform_1, window_bounds = array<i64: 1, 1, 1, 128>}, {transform_indices = @transform_2, window_bounds = array<i64: 1, 1, 1, 128>}, {transform_indices = @transform_3, window_bounds = array<i64: 1, 128, 1>}, {transform_indices = @transform_4, window_bounds = array<i64: 1, 1, 128, 128>}]} {
    %c0 = arith.constant 0 : index
    %c0_0 = arith.constant 0 : index
    %c0_1 = arith.constant 0 : index
    %c0_2 = arith.constant 0 : index
    %0 = vector.load %arg4[%c0, %c0_0, %c0_1, %c0_2] : memref<1x1x1x128xbf16, #tpu.memory_space<vmem>>, vector<1x1x1x128xbf16>
    %1 = vector.shape_cast %0 : vector<1x1x1x128xbf16> to vector<1x1x128xbf16>
    %c0_3 = arith.constant 0 : index
    %c0_4 = arith.constant 0 : index
    %c0_5 = arith.constant 0 : index
    %2 = vector.load %arg8[%c0_3, %c0_4, %c0_5] : memref<1x1x256xbf16, #tpu.memory_space<vmem>>, vector<1x1x128xbf16>
    tpu.vector_store %arg8[%c0_3, %c0_4, %c0_5], %1 {strides = array<i32>} : memref<1x1x256xbf16, #tpu.memory_space<vmem>>, vector<1x1x128xbf16>,
    %c0_6 = arith.constant 0 : index
    %c0_7 = arith.constant 0 : index
    %c0_8 = arith.constant 0 : index
    %c0_9 = arith.constant 0 : index
    %3 = vector.load %arg5[%c0_6, %c0_7, %c0_8, %c0_9] : memref<1x1x1x128xbf16, #tpu.memory_space<vmem>>, vector<1x1x1x128xbf16>
    %4 = vector.shape_cast %3 : vector<1x1x1x128xbf16> to vector<1x1x128xbf16>
    %c0_10 = arith.constant 0 : index
    %c0_11 = arith.constant 0 : index
    %c128 = arith.constant 128 : index
    %5 = vector.load %arg8[%c0_10, %c0_11, %c128] : memref<1x1x256xbf16, #tpu.memory_space<vmem>>, vector<1x1x128xbf16>
    tpu.vector_store %arg8[%c0_10, %c0_11, %c128], %4 {strides = array<i32>} : memref<1x1x256xbf16, #tpu.memory_space<vmem>>, vector<1x1x128xbf16>,
    %c0_12 = arith.constant 0 : index
    %c0_13 = arith.constant 0 : index
    %c0_14 = arith.constant 0 : index
    %6 = vector.load %arg8[%c0_12, %c0_13, %c0_14] : memref<1x1x256xbf16, #tpu.memory_space<vmem>>, vector<1x1x128xbf16>
    %7 = vector.shape_cast %6 : vector<1x1x128xbf16> to vector<1x128xbf16>
    %c0_15 = arith.constant 0 : index
    %c0_16 = arith.constant 0 : index
    %8 = vector.load %arg9[%c0_15, %c0_16] : memref<15x128xbf16, #tpu.memory_space<vmem>>, vector<1x128xbf16>
    tpu.vector_store %arg9[%c0_15, %c0_16], %7 {strides = array<i32>} : memref<15x128xbf16, #tpu.memory_space<vmem>>, vector<1x128xbf16>,
    %c0_17 = arith.constant 0 : index
    %c0_18 = arith.constant 0 : index
    %c1 = arith.constant 1 : index
    %9 = vector.load %arg8[%c0_17, %c0_18, %c1] : memref<1x1x256xbf16, #tpu.memory_space<vmem>>, vector<1x1x128xbf16>
    %10 = vector.shape_cast %9 : vector<1x1x128xbf16> to vector<1x128xbf16>
    %c1_19 = arith.constant 1 : index
    %c0_20 = arith.constant 0 : index
    %11 = vector.load %arg9[%c1_19, %c0_20] : memref<15x128xbf16, #tpu.memory_space<vmem>>, vector<1x128xbf16>
    tpu.vector_store %arg9[%c1_19, %c0_20], %10 {strides = array<i32>} : memref<15x128xbf16, #tpu.memory_space<vmem>>, vector<1x128xbf16>,
    %c0_21 = arith.constant 0 : index
    %c0_22 = arith.constant 0 : index
    %c2 = arith.constant 2 : index
    %12 = vector.load %arg8[%c0_21, %c0_22, %c2] : memref<1x1x256xbf16, #tpu.memory_space<vmem>>, vector<1x1x128xbf16>
    %13 = vector.shape_cast %12 : vector<1x1x128xbf16> to vector<1x128xbf16>
    %c2_23 = arith.constant 2 : index
    %c0_24 = arith.constant 0 : index
    %14 = vector.load %arg9[%c2_23, %c0_24] : memref<15x128xbf16, #tpu.memory_space<vmem>>, vector<1x128xbf16>
    tpu.vector_store %arg9[%c2_23, %c0_24], %13 {strides = array<i32>} : memref<15x128xbf16, #tpu.memory_space<vmem>>, vector<1x128xbf16>,
    %c0_25 = arith.constant 0 : index
    %c0_26 = arith.constant 0 : index
    %c3 = arith.constant 3 : index
    %15 = vector.load %arg8[%c0_25, %c0_26, %c3] : memref<1x1x256xbf16, #tpu.memory_space<vmem>>, vector<1x1x128xbf16>
    %16 = vector.shape_cast %15 : vector<1x1x128xbf16> to vector<1x128xbf16>
    %c3_27 = arith.constant 3 : index
    %c0_28 = arith.constant 0 : index
    %17 = vector.load %arg9[%c3_27, %c0_28] : memref<15x128xbf16, #tpu.memory_space<vmem>>, vector<1x128xbf16>
    tpu.vector_store %arg9[%c3_27, %c0_28], %16 {strides = array<i32>} : memref<15x128xbf16, #tpu.memory_space<vmem>>, vector<1x128xbf16>,
    %c0_29 = arith.constant 0 : index
    %c0_30 = arith.constant 0 : index
    %c4 = arith.constant 4 : index
    %18 = vector.load %arg8[%c0_29, %c0_30, %c4] : memref<1x1x256xbf16, #tpu.memory_space<vmem>>, vector<1x1x128xbf16>
    %19 = vector.shape_cast %18 : vector<1x1x128xbf16> to vector<1x128xbf16>
    %c4_31 = arith.constant 4 : index
    %c0_32 = arith.constant 0 : index
    %20 = vector.load %arg9[%c4_31, %c0_32] : memref<15x128xbf16, #tpu.memory_space<vmem>>, vector<1x128xbf16>
    tpu.vector_store %arg9[%c4_31, %c0_32], %19 {strides = array<i32>} : memref<15x128xbf16, #tpu.memory_space<vmem>>, vector<1x128xbf16>,
    %c0_33 = arith.constant 0 : index
    %c0_34 = arith.constant 0 : index
    %c5 = arith.constant 5 : index
    %21 = vector.load %arg8[%c0_33, %c0_34, %c5] : memref<1x1x256xbf16, #tpu.memory_space<vmem>>, vector<1x1x128xbf16>
    %22 = vector.shape_cast %21 : vector<1x1x128xbf16> to vector<1x128xbf16>
    %c5_35 = arith.constant 5 : index
    %c0_36 = arith.constant 0 : index
    %23 = vector.load %arg9[%c5_35, %c0_36] : memref<15x128xbf16, #tpu.memory_space<vmem>>, vector<1x128xbf16>
    tpu.vector_store %arg9[%c5_35, %c0_36], %22 {strides = array<i32>} : memref<15x128xbf16, #tpu.memory_space<vmem>>, vector<1x128xbf16>,
    %c0_37 = arith.constant 0 : index
    %c0_38 = arith.constant 0 : index
    %c6 = arith.constant 6 : index
    %24 = vector.load %arg8[%c0_37, %c0_38, %c6] : memref<1x1x256xbf16, #tpu.memory_space<vmem>>, vector<1x1x128xbf16>
    %25 = vector.shape_cast %24 : vector<1x1x128xbf16> to vector<1x128xbf16>
    %c6_39 = arith.constant 6 : index
    %c0_40 = arith.constant 0 : index
    %26 = vector.load %arg9[%c6_39, %c0_40] : memref<15x128xbf16, #tpu.memory_space<vmem>>, vector<1x128xbf16>
    tpu.vector_store %arg9[%c6_39, %c0_40], %25 {strides = array<i32>} : memref<15x128xbf16, #tpu.memory_space<vmem>>, vector<1x128xbf16>,
    %c0_41 = arith.constant 0 : index
    %c0_42 = arith.constant 0 : index
    %c7 = arith.constant 7 : index
    %27 = vector.load %arg8[%c0_41, %c0_42, %c7] : memref<1x1x256xbf16, #tpu.memory_space<vmem>>, vector<1x1x128xbf16>
    %28 = vector.shape_cast %27 : vector<1x1x128xbf16> to vector<1x128xbf16>
    %c7_43 = arith.constant 7 : index
    %c0_44 = arith.constant 0 : index
    %29 = vector.load %arg9[%c7_43, %c0_44] : memref<15x128xbf16, #tpu.memory_space<vmem>>, vector<1x128xbf16>
    tpu.vector_store %arg9[%c7_43, %c0_44], %28 {strides = array<i32>} : memref<15x128xbf16, #tpu.memory_space<vmem>>, vector<1x128xbf16>,
    %c0_45 = arith.constant 0 : index
    %c0_46 = arith.constant 0 : index
    %c8 = arith.constant 8 : index
    %30 = vector.load %arg8[%c0_45, %c0_46, %c8] : memref<1x1x256xbf16, #tpu.memory_space<vmem>>, vector<1x1x128xbf16>
    %31 = vector.shape_cast %30 : vector<1x1x128xbf16> to vector<1x128xbf16>
    %c8_47 = arith.constant 8 : index
    %c0_48 = arith.constant 0 : index
    %32 = vector.load %arg9[%c8_47, %c0_48] : memref<15x128xbf16, #tpu.memory_space<vmem>>, vector<1x128xbf16>
    tpu.vector_store %arg9[%c8_47, %c0_48], %31 {strides = array<i32>} : memref<15x128xbf16, #tpu.memory_space<vmem>>, vector<1x128xbf16>,
    %c0_49 = arith.constant 0 : index
    %c0_50 = arith.constant 0 : index
    %c9 = arith.constant 9 : index
    %33 = vector.load %arg8[%c0_49, %c0_50, %c9] : memref<1x1x256xbf16, #tpu.memory_space<vmem>>, vector<1x1x128xbf16>
    %34 = vector.shape_cast %33 : vector<1x1x128xbf16> to vector<1x128xbf16>
    %c9_51 = arith.constant 9 : index
    %c0_52 = arith.constant 0 : index
    %35 = vector.load %arg9[%c9_51, %c0_52] : memref<15x128xbf16, #tpu.memory_space<vmem>>, vector<1x128xbf16>
    tpu.vector_store %arg9[%c9_51, %c0_52], %34 {strides = array<i32>} : memref<15x128xbf16, #tpu.memory_space<vmem>>, vector<1x128xbf16>,
    %c0_53 = arith.constant 0 : index
    %c0_54 = arith.constant 0 : index
    %c10 = arith.constant 10 : index
    %36 = vector.load %arg8[%c0_53, %c0_54, %c10] : memref<1x1x256xbf16, #tpu.memory_space<vmem>>, vector<1x1x128xbf16>
    %37 = vector.shape_cast %36 : vector<1x1x128xbf16> to vector<1x128xbf16>
    %c10_55 = arith.constant 10 : index
    %c0_56 = arith.constant 0 : index
    %38 = vector.load %arg9[%c10_55, %c0_56] : memref<15x128xbf16, #tpu.memory_space<vmem>>, vector<1x128xbf16>
    tpu.vector_store %arg9[%c10_55, %c0_56], %37 {strides = array<i32>} : memref<15x128xbf16, #tpu.memory_space<vmem>>, vector<1x128xbf16>,
    %c0_57 = arith.constant 0 : index
    %c0_58 = arith.constant 0 : index
    %c11 = arith.constant 11 : index
    %39 = vector.load %arg8[%c0_57, %c0_58, %c11] : memref<1x1x256xbf16, #tpu.memory_space<vmem>>, vector<1x1x128xbf16>
    %40 = vector.shape_cast %39 : vector<1x1x128xbf16> to vector<1x128xbf16>
    %c11_59 = arith.constant 11 : index
    %c0_60 = arith.constant 0 : index
    %41 = vector.load %arg9[%c11_59, %c0_60] : memref<15x128xbf16, #tpu.memory_space<vmem>>, vector<1x128xbf16>
    tpu.vector_store %arg9[%c11_59, %c0_60], %40 {strides = array<i32>} : memref<15x128xbf16, #tpu.memory_space<vmem>>, vector<1x128xbf16>,
    %c0_61 = arith.constant 0 : index
    %c0_62 = arith.constant 0 : index
    %c12 = arith.constant 12 : index
    %42 = vector.load %arg8[%c0_61, %c0_62, %c12] : memref<1x1x256xbf16, #tpu.memory_space<vmem>>, vector<1x1x128xbf16>
    %43 = vector.shape_cast %42 : vector<1x1x128xbf16> to vector<1x128xbf16>
    %c12_63 = arith.constant 12 : index
    %c0_64 = arith.constant 0 : index
    %44 = vector.load %arg9[%c12_63, %c0_64] : memref<15x128xbf16, #tpu.memory_space<vmem>>, vector<1x128xbf16>
    tpu.vector_store %arg9[%c12_63, %c0_64], %43 {strides = array<i32>} : memref<15x128xbf16, #tpu.memory_space<vmem>>, vector<1x128xbf16>,
    %c0_65 = arith.constant 0 : index
    %c0_66 = arith.constant 0 : index
    %c13 = arith.constant 13 : index
    %45 = vector.load %arg8[%c0_65, %c0_66, %c13] : memref<1x1x256xbf16, #tpu.memory_space<vmem>>, vector<1x1x128xbf16>
    %46 = vector.shape_cast %45 : vector<1x1x128xbf16> to vector<1x128xbf16>
    %c13_67 = arith.constant 13 : index
    %c0_68 = arith.constant 0 : index
    %47 = vector.load %arg9[%c13_67, %c0_68] : memref<15x128xbf16, #tpu.memory_space<vmem>>, vector<1x128xbf16>
    tpu.vector_store %arg9[%c13_67, %c0_68], %46 {strides = array<i32>} : memref<15x128xbf16, #tpu.memory_space<vmem>>, vector<1x128xbf16>,
    %c0_69 = arith.constant 0 : index
    %c0_70 = arith.constant 0 : index
    %c14 = arith.constant 14 : index
    %48 = vector.load %arg8[%c0_69, %c0_70, %c14] : memref<1x1x256xbf16, #tpu.memory_space<vmem>>, vector<1x1x128xbf16>
    %49 = vector.shape_cast %48 : vector<1x1x128xbf16> to vector<1x128xbf16>
    %c14_71 = arith.constant 14 : index
    %c0_72 = arith.constant 0 : index
    %50 = vector.load %arg9[%c14_71, %c0_72] : memref<15x128xbf16, #tpu.memory_space<vmem>>, vector<1x128xbf16>
    tpu.vector_store %arg9[%c14_71, %c0_72], %49 {strides = array<i32>} : memref<15x128xbf16, #tpu.memory_space<vmem>>, vector<1x128xbf16>,
    %c0_73 = arith.constant 0 : index
    %c0_74 = arith.constant 0 : index
    %c0_75 = arith.constant 0 : index
    %51 = vector.load %arg3[%c0_73, %c0_74, %c0_75] : memref<1x128x15xbf16, #tpu.memory_space<vmem>>, vector<1x128x15xbf16>
    %52 = vector.shape_cast %51 : vector<1x128x15xbf16> to vector<128x15xbf16>
    %c0_76 = arith.constant 0 : index
    %c0_77 = arith.constant 0 : index
    %53 = vector.load %arg9[%c0_76, %c0_77] : memref<15x128xbf16, #tpu.memory_space<vmem>>, vector<15x128xbf16>
    %cst = arith.constant dense<0.000000e+00> : vector<128x128xf32>
    %54 = tpu.matmul %52, %53, %cst {dimension_numbers = #tpu.dot_dimension_numbers<[1], [0], [0], [1], [0, 0, 1, 1], [], []>} : vector<128x15xbf16>, vector<15x128xbf16>, vector<128x128xf32> -> vector<128x128xf32>
    %c0_78 = arith.constant 0 : index
    %c0_79 = arith.constant 0 : index
    %c0_80 = arith.constant 0 : index
    %55 = vector.load %arg6[%c0_78, %c0_79, %c0_80] : memref<1x128x1xf32, #tpu.memory_space<vmem>>, vector<1x128x1xf32>
    %56 = vector.shape_cast %55 : vector<1x128x1xf32> to vector<128x1xf32>
    %57 = vector.broadcast %56 : vector<128x1xf32> to vector<128x128xf32>
    %58 = arith.addf %54, %57 : vector<128x128xf32>
    %cst_81 = arith.constant 0.000000e+00 : f32
    %59 = vector.broadcast %cst_81 : f32 to vector<128x128xf32>
    %60 = arith.cmpf oge, %58, %59 : vector<128x128xf32>
    %cst_82 = arith.constant 1.000000e-01 : f32
    %61 = vector.broadcast %cst_82 : f32 to vector<128x128xf32>
    %62 = arith.mulf %58, %61 : vector<128x128xf32>
    %63 = arith.select %60, %58, %62 : vector<128x128xi1>, vector<128x128xf32>
    %c0_83 = arith.constant 0 : index
    %c0_84 = arith.constant 0 : index
    %c0_85 = arith.constant 0 : index
    %c0_86 = arith.constant 0 : index
    %64 = vector.load %arg7[%c0_83, %c0_84, %c0_85, %c0_86] : memref<1x1x128x128xf32, #tpu.memory_space<vmem>>, vector<1x1x128x128xf32>
    %65 = vector.shape_cast %64 : vector<1x1x128x128xf32> to vector<128x128xf32>
    %66 = vector.shape_cast %63 : vector<128x128xf32> to vector<1x1x128x128xf32>
    tpu.vector_store %arg7[%c0_83, %c0_84, %c0_85, %c0_86], %66 {strides = array<i32>} : memref<1x1x128x128xf32, #tpu.memory_space<vmem>>, vector<1x1x128x128xf32>,
    return
  }
  func.func @transform_0(%arg0: i32, %arg1: i32, %arg2: i32) -> (i32, i32, i32) {
    %c0_i32 = arith.constant 0 : i32
    %c0_i32_0 = arith.constant 0 : i32
    %c0_i32_1 = arith.constant 0 : i32
    return %arg0, %c0_i32, %c0_i32_0 : i32, i32, i32
  }
  func.func @transform_1(%arg0: i32, %arg1: i32, %arg2: i32) -> (i32, i32, i32, i32) {
    %c0_i32 = arith.constant 0 : i32
    %c0_i32_0 = arith.constant 0 : i32
    return %arg1, %arg0, %c0_i32, %arg2 : i32, i32, i32, i32
  }
  func.func @transform_2(%arg0: i32, %arg1: i32, %arg2: i32) -> (i32, i32, i32, i32) {
    %c1_i32 = arith.constant 1 : i32
    %0 = arith.addi %arg2, %c1_i32 : i32
    %c1_i32_0 = arith.constant 1 : i32
    %1 = arith.muli %0, %c1_i32_0 : i32
    %c0_i32 = arith.constant 0 : i32
    %c0_i32_1 = arith.constant 0 : i32
    return %arg1, %arg0, %c0_i32, %1 : i32, i32, i32, i32
  }
  func.func @transform_3(%arg0: i32, %arg1: i32, %arg2: i32) -> (i32, i32, i32) {
    %c0_i32 = arith.constant 0 : i32
    %c0_i32_0 = arith.constant 0 : i32
    %c0_i32_1 = arith.constant 0 : i32
    return %arg0, %c0_i32, %c0_i32_0 : i32, i32, i32
  }
  func.func @transform_4(%arg0: i32, %arg1: i32, %arg2: i32) -> (i32, i32, i32, i32) {
    %c0_i32 = arith.constant 0 : i32
    %c0_i32_0 = arith.constant 0 : i32
    return %arg1, %arg0, %c0_i32, %arg2 : i32, i32, i32, i32
  }
}

</mosaic_0001>

<llo_original>
// kernel: conv1d_pallas.1
$region0: #{conv1d_pallas.1}
  #allocation0 [shape = 'u32[]', space=smem, size = 0x4, offset = 0x4, fixed_abs, tag = 'smem constant byte address 0x4 - core index']
  #allocation1 [shape = 'u32[72,128]{1,0:T(1,128)}', space=vmem, size = 0x9000, scoped, tag = 'internal scratch']
  #allocation2 [shape = 'bf16[1,1,256]{2,1,0:T(2,128)(2,1)}', space=vmem, size = 0x400, scoped, tag = 'scratch operand']
  #allocation3 [shape = 'bf16[15,128]{1,0:T(8,128)(2,1)}', space=vmem, size = 0x1000, scoped, tag = 'scratch operand']
  %s0 = inlined_call_operand.vmem [shape: bf16[1,128,15], index: 0, kind: input, shape index: {}]
  %s1 = inlined_call_operand.vmem [shape: bf16[2,1,1,256], index: 1, kind: input, shape index: {}, may-alias: {1,2}]
  %s2 = inlined_call_operand.vmem [shape: bf16[2,1,1,256], index: 2, kind: input, shape index: {}, may-alias: {1,2}]
  %s3 = inlined_call_operand.vmem [shape: f32[1,128,1], index: 3, kind: input, shape index: {}]
  %s4 = inlined_call_operand.vmem [shape: f32[2,1,128,128], index: 4, kind: output, shape index: {}]
  %s5 = sld [smem:[#allocation0]]
  $region49: #{conv1d_pallas.1} parent=0
    _
  %s7 = ssub.s32 1, %s5
  %s8 = scalar_select 0, %s7, %s5
  loop: start=0, step=1, limit=4
  $region2: #{conv1d_pallas.1} parent=0 // loop_pre_header
    _
  $region3: #{conv1d_pallas.1} parent=0 // loop_header
    %s10 = sphi 0, %s14
    %p11 = scmp.ge.s32.totalorder %s10, 4
    %s17 = sphi 0, %s36
    %s18 = sphi 0, %s32
    %s19 = sphi 0, %s28
    %s20 = sphi 0, %s17
    %s21 = sphi 0, %s18
    %s22 = sphi 0, %s19
    %s23 = sphi 0, %s20
    %s24 = sphi 0, %s21
    %s25 = sphi 0, %s22
    %s39 = sphi 0, %s41
    %s42 = sphi 0, %s39
    %s43 = sphi 0, %s42
    %s59 = sphi 0, %s43
    %s69 = sphi 0, %s71
    %s72 = sphi 0, %s69
    %s73 = sphi 0, %s72
    %s89 = sphi 0, %s73
    %s101 = sphi 0, %s103
    %s104 = sphi 0, %s101
    %s105 = sphi 0, %s104
    %s121 = sphi 0, %s105
    %s127 = sphi 0, %s129
    %s130 = sphi 0, %s127
    %s131 = sphi 0, %s130
    %s147 = sphi 0, %s131
    %s157 = sphi 0, %s159
    %s160 = sphi 0, %s157
    %s161 = sphi 0, %s160
    %s177 = sphi 0, %s161
  $region4: #{conv1d_pallas.1} parent=0 // loop_header_branch
    %13 = sbr.rel (%p11) target = $region8
  $region5: #{conv1d_pallas.1} parent=0 // loop_body
    %s15 = ssub.s32 %s10, 1
    %s16 = ssub.s32 %s10, 2
    %s26 = sadd.s32 1, %s19
    %p27 = scmp.ge.s32.totalorder %s26, 1
    %s28 = scalar_select %p27, 0, %s26
    %s29 = sadd.s32 1, %s18
    %s30 = scalar_select %p27, %s29, %s18
    %p31 = scmp.ge.s32.totalorder %s30, 2
    %s32 = scalar_select %p31, 0, %s30
    %s33 = sadd.s32 1, %s17
    %s34 = scalar_select %p31, %s33, %s17
    %p35 = scmp.ge.s32.totalorder %s34, 1
    %s36 = scalar_select %p35, 0, %s34
    %s37 = ssub.s32 %s17, %s36
    %p38 = scmp.eq.s32.totalorder %s37, 0
    %s40 = sadd.s32 %s39, 1
    %s41 = scalar_select %p38, %s39, %s40
    %p44 = pneg %p38
    %p45 = scmp.eq.s32.totalorder %s10, 1
    %p46 = por %p44, %p45
    %p47 = scmp.ne.s32.totalorder %s39, %s42
    %p48 = scmp.eq.s32.totalorder %s10, 0
    %p49 = por %p47, %p48
    %p50 = scmp.ne.s32.totalorder %s39, %s42
    %p51 = scmp.eq.s32.totalorder %s15, 1
    %p52 = por %p50, %p51
    %p53 = scmp.ne.s32.totalorder %s42, %s43
    %p54 = scmp.eq.s32.totalorder %s15, 0
    %p55 = por %p53, %p54
    %p56 = scmp.ne.s32.totalorder %s42, %s43
    %p57 = scmp.eq.s32.totalorder %s16, 1
    %p58 = por %p56, %p57
    %p60 = scmp.ne.s32.totalorder %s43, %s59
    %p61 = scmp.eq.s32.totalorder %s16, 0
    %p62 = por %p60, %p61
    %s63 = ssub.s32 %s18, %s32
    %s64 = ssub.s32 %s17, %s36
    %s65 = sor.u32 %s63, %s64
    %s66 = ssub.s32 %s19, %s28
    %s67 = sor.u32 %s65, %s66
    %p68 = scmp.eq.s32.totalorder %s67, 0
    %s70 = sadd.s32 %s69, 1
    %s71 = scalar_select %p68, %s69, %s70
    %p74 = pneg %p68
    %p75 = scmp.eq.s32.totalorder %s10, 1
    %p76 = por %p74, %p75
    %p77 = scmp.ne.s32.totalorder %s69, %s72
    %p78 = scmp.eq.s32.totalorder %s10, 0
    %p79 = por %p77, %p78
    %p80 = scmp.ne.s32.totalorder %s69, %s72
    %p81 = scmp.eq.s32.totalorder %s15, 1
    %p82 = por %p80, %p81
    %p83 = scmp.ne.s32.totalorder %s72, %s73
    %p84 = scmp.eq.s32.totalorder %s15, 0
    %p85 = por %p83, %p84
    %p86 = scmp.ne.s32.totalorder %s72, %s73
    %p87 = scmp.eq.s32.totalorder %s16, 1
    %p88 = por %p86, %p87
    %p90 = scmp.ne.s32.totalorder %s73, %s89
    %p91 = scmp.eq.s32.totalorder %s16, 0
    %p92 = por %p90, %p91
    %s93 = sadd.s32 %s19, 1
    %s94 = sadd.s32 %s28, 1
    %s95 = ssub.s32 %s18, %s32
    %s96 = ssub.s32 %s17, %s36
    %s97 = sor.u32 %s95, %s96
    %s98 = ssub.s32 %s93, %s94
    %s99 = sor.u32 %s97, %s98
    %p100 = scmp.eq.s32.totalorder %s99, 0
    %s102 = sadd.s32 %s101, 1
    %s103 = scalar_select %p100, %s101, %s102
    %p106 = pneg %p100
    %p107 = scmp.eq.s32.totalorder %s10, 1
    %p108 = por %p106, %p107
    %p109 = scmp.ne.s32.totalorder %s101, %s104
    %p110 = scmp.eq.s32.totalorder %s10, 0
    %p111 = por %p109, %p110
    %p112 = scmp.ne.s32.totalorder %s101, %s104
    %p113 = scmp.eq.s32.totalorder %s15, 1
    %p114 = por %p112, %p113
    %p115 = scmp.ne.s32.totalorder %s104, %s105
    %p116 = scmp.eq.s32.totalorder %s15, 0
    %p117 = por %p115, %p116
    %p118 = scmp.ne.s32.totalorder %s104, %s105
    %p119 = scmp.eq.s32.totalorder %s16, 1
    %p120 = por %p118, %p119
    %p122 = scmp.ne.s32.totalorder %s105, %s121
    %p123 = scmp.eq.s32.totalorder %s16, 0
    %p124 = por %p122, %p123
    %s125 = ssub.s32 %s17, %s36
    %p126 = scmp.eq.s32.totalorder %s125, 0
    %s128 = sadd.s32 %s127, 1
    %s129 = scalar_select %p126, %s127, %s128
    %p132 = pneg %p126
    %p133 = scmp.eq.s32.totalorder %s10, 1
    %p134 = por %p132, %p133
    %p135 = scmp.ne.s32.totalorder %s127, %s130
    %p136 = scmp.eq.s32.totalorder %s10, 0
    %p137 = por %p135, %p136
    %p138 = scmp.ne.s32.totalorder %s127, %s130
    %p139 = scmp.eq.s32.totalorder %s15, 1
    %p140 = por %p138, %p139
    %p141 = scmp.ne.s32.totalorder %s130, %s131
    %p142 = scmp.eq.s32.totalorder %s15, 0
    %p143 = por %p141, %p142
    %p144 = scmp.ne.s32.totalorder %s130, %s131
    %p145 = scmp.eq.s32.totalorder %s16, 1
    %p146 = por %p144, %p145
    %p148 = scmp.ne.s32.totalorder %s131, %s147
    %p149 = scmp.eq.s32.totalorder %s16, 0
    %p150 = por %p148, %p149
    %s151 = ssub.s32 %s18, %s32
    %s152 = ssub.s32 %s17, %s36
    %s153 = sor.u32 %s151, %s152
    %s154 = ssub.s32 %s19, %s28
    %s155 = sor.u32 %s153, %s154
    %p156 = scmp.eq.s32.totalorder %s155, 0
    %s158 = sadd.s32 %s157, 1
    %s159 = scalar_select %p156, %s157, %s158
    %p162 = pneg %p156
    %p163 = scmp.eq.s32.totalorder %s10, 1
    %p164 = por %p162, %p163
    %p165 = scmp.ne.s32.totalorder %s157, %s160
    %p166 = scmp.eq.s32.totalorder %s10, 0
    %p167 = por %p165, %p166
    %p168 = scmp.ne.s32.totalorder %s157, %s160
    %p169 = scmp.eq.s32.totalorder %s15, 1
    %p170 = por %p168, %p169
    %p171 = scmp.ne.s32.totalorder %s160, %s161
    %p172 = scmp.eq.s32.totalorder %s15, 0
    %p173 = por %p171, %p172
    %p174 = scmp.ne.s32.totalorder %s160, %s161
    %p175 = scmp.eq.s32.totalorder %s16, 1
    %p176 = por %p174, %p175
    %p178 = scmp.ne.s32.totalorder %s161, %s177
    %p179 = scmp.eq.s32.totalorder %s16, 0
    %p180 = por %p178, %p179
    %p181 = scmp.le.s32.totalorder 1, %s10
    %p182 = scmp.lt.s32.totalorder %s10, 3
    %p183 = pnand %p181, %p182
    %p184 = pneg %p183
    // Predicated region
    $region9: #{conv1d_pallas.1} parent=5 // pred_check
      _
    $region10: #{conv1d_pallas.1} parent=5 // pred_check_branch
      %186 = sbr.rel (%p183) target = $region12
    $region11: #{conv1d_pallas.1} parent=5 // pred_region
      %s187 = ssub.s32 %s10, 1
      // Predicated region
      $region13: #{conv1d_pallas.1} parent=11 // pred_check
        %p188 = pneg %p55
      $region14: #{conv1d_pallas.1} parent=11 // pred_check_branch
        %190 = sbr.rel (%p188) target = $region16
      $region15: #{conv1d_pallas.1} parent=11 // pred_region
        %p191 = scmp.lt.s32.totalorder %s20, 0
        %s192 = scalar_select %p191, %s20, 0
        %s193 = smul.addr %s192, 16
        %s194 = smul.addr %s193, 4
        %s195 = scalar_lea.vmem %s0, %s194
      $region16: #{conv1d_pallas.1} parent=11 // pred_fallthru
        _
      // Predicated region
      $region17: #{conv1d_pallas.1} parent=11 // pred_check
        %p196 = pneg %p143
      $region18: #{conv1d_pallas.1} parent=11 // pred_check_branch
        %198 = sbr.rel (%p196) target = $region20
      $region19: #{conv1d_pallas.1} parent=11 // pred_region
        %p199 = scmp.lt.s32.totalorder %s20, 0
        %s200 = scalar_select %p199, %s20, 0
        %s201 = smul.addr %s200, 16
        %s202 = smul.addr %s201, 8
        %s203 = scalar_lea.vmem %s3, %s202
      $region20: #{conv1d_pallas.1} parent=11 // pred_fallthru
        _
    $region12: #{conv1d_pallas.1} parent=5 // pred_fallthru
      _
    %p204 = scmp.lt.s32.totalorder %s10, 2
    // Predicated region
    $region21: #{conv1d_pallas.1} parent=5 // pred_check
      %p205 = pneg %p204
    $region22: #{conv1d_pallas.1} parent=5 // pred_check_branch
      %207 = sbr.rel (%p205) target = $region24
    $region23: #{conv1d_pallas.1} parent=5 // pred_region
      // Predicated region
      $region25: #{conv1d_pallas.1} parent=23 // pred_check
        %p208 = pneg %p79
      $region26: #{conv1d_pallas.1} parent=23 // pred_check_branch
        %210 = sbr.rel (%p208) target = $region28
      $region27: #{conv1d_pallas.1} parent=23 // pred_region
        %p211 = scmp.lt.s32.totalorder %s18, 1
        %s212 = scalar_select %p211, %s18, 1
        %p213 = scmp.lt.s32.totalorder %s17, 0
        %s214 = scalar_select %p213, %s17, 0
        %p215 = scmp.lt.s32.totalorder %s19, 1
        %s216 = scalar_select %p215, %s19, 1
        %s217 = smul.addr %s214, 2
        %s218 = sadd.s32 %s216, %s217
        %s219 = smul.addr %s212, 2
        %s220 = sadd.s32 %s218, %s219
        %s221 = scalar_lea.vmem %s1, %s220
      $region28: #{conv1d_pallas.1} parent=23 // pred_fallthru
        _
      // Predicated region
      $region29: #{conv1d_pallas.1} parent=23 // pred_check
        %p222 = pneg %p111
      $region30: #{conv1d_pallas.1} parent=23 // pred_check_branch
        %224 = sbr.rel (%p222) target = $region32
      $region31: #{conv1d_pallas.1} parent=23 // pred_region
        %s225 = sadd.s32 %s19, 1
        %p226 = scmp.lt.s32.totalorder %s18, 1
        %s227 = scalar_select %p226, %s18, 1
        %p228 = scmp.lt.s32.totalorder %s17, 0
        %s229 = scalar_select %p228, %s17, 0
        %p230 = scmp.lt.s32.totalorder %s225, 1
        %s231 = scalar_select %p230, %s225, 1
        %s232 = smul.addr %s229, 2
        %s233 = sadd.s32 %s231, %s232
        %s234 = smul.addr %s227, 2
        %s235 = sadd.s32 %s233, %s234
        %s236 = scalar_lea.vmem %s2, %s235
        %s237 = sadd.s32 %s19, 1
      $region32: #{conv1d_pallas.1} parent=23 // pred_fallthru
        _
    $region24: #{conv1d_pallas.1} parent=5 // pred_fallthru
      _
    %p238 = scmp.le.s32.totalorder 1, %s10
    %p239 = scmp.lt.s32.totalorder %s10, 3
    %p240 = pnand %p238, %p239
    %p241 = pneg %p240
    // Predicated region
    $region33: #{conv1d_pallas.1} parent=5 // pred_check
      _
    $region34: #{conv1d_pallas.1} parent=5 // pred_check_branch
      %243 = sbr.rel (%p240) target = $region36
    $region35: #{conv1d_pallas.1} parent=5 // pred_region
      %s244 = ssub.s32 %s10, 1
      %p245 = scmp.lt.s32.totalorder %s20, 0
      %s246 = scalar_select %p245, %s20, 0
      %s247 = smul.addr %s246, 16
      %s248 = smul.addr %s247, 4
      %s249 = scalar_lea.vmem %s0, %s248
      %p250 = pneg %p55
      %p251 = pneg %p52
      %p252 = scmp.lt.s32.totalorder %s21, 1
      %s253 = scalar_select %p252, %s21, 1
      %p254 = scmp.lt.s32.totalorder %s20, 0
      %s255 = scalar_select %p254, %s20, 0
      %p256 = scmp.lt.s32.totalorder %s22, 1
      %s257 = scalar_select %p256, %s22, 1
      %s258 = smul.addr %s255, 2
      %s259 = sadd.s32 %s257, %s258
      %s260 = smul.addr %s253, 2
      %s261 = sadd.s32 %s259, %s260
      %s262 = scalar_lea.vmem %s1, %s261
      %p263 = pneg %p85
      %p264 = pneg %p82
      %s265 = sadd.s32 %s22, 1
      %p266 = scmp.lt.s32.totalorder %s21, 1
      %s267 = scalar_select %p266, %s21, 1
      %p268 = scmp.lt.s32.totalorder %s20, 0
      %s269 = scalar_select %p268, %s20, 0
      %p270 = scmp.lt.s32.totalorder %s265, 1
      %s271 = scalar_select %p270, %s265, 1
      %s272 = smul.addr %s269, 2
      %s273 = sadd.s32 %s271, %s272
      %s274 = smul.addr %s267, 2
      %s275 = sadd.s32 %s273, %s274
      %s276 = scalar_lea.vmem %s2, %s275
      %p277 = pneg %p117
      %p278 = pneg %p114
      %p279 = scmp.lt.s32.totalorder %s20, 0
      %s280 = scalar_select %p279, %s20, 0
      %s281 = smul.addr %s280, 16
      %s282 = smul.addr %s281, 8
      %s283 = scalar_lea.vmem %s3, %s282
      %p284 = pneg %p143
      %p285 = pneg %p140
      %p286 = pneg %p173
      %p287 = pneg %p170
      %p288 = scmp.lt.s32.totalorder %s21, 1
      %s289 = scalar_select %p288, %s21, 1
      %p290 = scmp.lt.s32.totalorder %s20, 0
      %s291 = scalar_select %p290, %s20, 0
      %p292 = scmp.lt.s32.totalorder %s22, 0
      %s293 = scalar_select %p292, %s22, 0
      %s294 = smul.addr %s291, 16
      %s295 = sadd.s32 %s293, %s294
      %s296 = smul.addr %s289, 16
      %s297 = sadd.s32 %s295, %s296
      %s298 = smul.addr %s297, 8
      %s299 = scalar_lea.vmem %s4, %s298
      %p300 = scmp.lt.s32.totalorder %s20, 0
      %s301 = scalar_select %p300, %s20, 0
      %s302 = smul.addr %s301, 16
      %s303 = smul.addr %s302, 4
      %s304 = scalar_lea.vmem %s0, %s303
      %p305 = scmp.lt.s32.totalorder %s21, 1
      %s306 = scalar_select %p305, %s21, 1
      %p307 = scmp.lt.s32.totalorder %s20, 0
      %s308 = scalar_select %p307, %s20, 0
      %p309 = scmp.lt.s32.totalorder %s22, 1
      %s310 = scalar_select %p309, %s22, 1
      %s311 = smul.addr %s308, 2
      %s312 = sadd.s32 %s310, %s311
      %s313 = smul.addr %s306, 2
      %s314 = sadd.s32 %s312, %s313
      %s315 = scalar_lea.vmem %s1, %s314
      %s316 = sadd.s32 %s22, 1
      %p317 = scmp.lt.s32.totalorder %s21, 1
      %s318 = scalar_select %p317, %s21, 1
      %p319 = scmp.lt.s32.totalorder %s20, 0
      %s320 = scalar_select %p319, %s20, 0
      %p321 = scmp.lt.s32.totalorder %s316, 1
      %s322 = scalar_select %p321, %s316, 1
      %s323 = smul.addr %s320, 2
      %s324 = sadd.s32 %s322, %s323
      %s325 = smul.addr %s318, 2
      %s326 = sadd.s32 %s324, %s325
      %s327 = scalar_lea.vmem %s2, %s326
      %s328 = sadd.s32 %s22, 1
      %p329 = scmp.lt.s32.totalorder %s20, 0
      %s330 = scalar_select %p329, %s20, 0
      %s331 = smul.addr %s330, 16
      %s332 = smul.addr %s331, 8
      %s333 = scalar_lea.vmem %s3, %s332
      %p334 = scmp.lt.s32.totalorder %s21, 1
      %s335 = scalar_select %p334, %s21, 1
      %p336 = scmp.lt.s32.totalorder %s20, 0
      %s337 = scalar_select %p336, %s20, 0
      %p338 = scmp.lt.s32.totalorder %s22, 0
      %s339 = scalar_select %p338, %s22, 0
      %s340 = smul.addr %s337, 16
      %s341 = sadd.s32 %s339, %s340
      %s342 = smul.addr %s335, 16
      %s343 = sadd.s32 %s341, %s342
      %s344 = smul.addr %s343, 8
      %s345 = scalar_lea.vmem %s4, %s344
      %v347 = vld [vmem:[%s315] sm:$0x1]
      %vm348 = vcmask 1040384
      %vm349 = vsmask.f32 256
      %vm350 = vmand %vm348, %vm349
      %v351 = vld [vmem:[#allocation2] sm:$0x1]
      %v352 = vsel %vm350, %v347, %v351
      %353 = vst [vmem:[#allocation2] sm:$0x1] %v352
      %v354 = vld [vmem:[%s327] sm:$0x1]
      %v355 = vld [vmem:[#allocation2 + $0x1] sm:$0x1]
      %v356 = vsel %vm350, %v354, %v355
      %357 = vst [vmem:[#allocation2 + $0x1] sm:$0x1] %v356
      %v358 = vld [vmem:[#allocation2] sm:$0x1]
      %v359 = vld [vmem:[#allocation3] sm:$0x1]
      %v360 = vsel %vm350, %v358, %v359
      %361 = vst [vmem:[#allocation3] sm:$0x1] %v360
      %v362 = vld [vmem:[#allocation2] sm:$0x3]
      %364 = vst [vmem:[#allocation1] ss:$4 sm:$0xff] %v362
      %v365 = vld [vmem:[#allocation1] sm:$0xff]
      %v366 = vshll.u32 %v365, 16
      %368 = vrot.lane.b32.xlu0 %v366, 127
      %v369 = vpop.permute.xlu0 %368
      %v370 = vrot.slane %v369, 4
      %vm371 = vcmask 1039360
      %v372 = vsel %vm371, %v369, %v370
      %vm374 = vsmask.f32 7938
      %vm375 = vmand %vm348, %vm374
      %v376 = vld [vmem:[#allocation3] sm:$0x1]
      %v377 = vsel %vm375, %v372, %v376
      %378 = vst [vmem:[#allocation3] sm:$0x1] %v377
      %v379 = vld [vmem:[#allocation2] sm:$0x3]
      %s381 = scalar_lea.vmem [#allocation1], 1
      %382 = vst [vmem:[%s381] ss:$4 sm:$0xff] %v379
      %v383 = vld [vmem:[#allocation1] sm:$0xff]
      %385 = vrot.lane.b32.xlu0 %v383, 126
      %v386 = vpop.permute.xlu0 %385
      %v387 = vrot.slane %v386, 4
      %vm388 = vcmask 1031168
      %v389 = vsel %vm388, %v386, %v387
      %vm391 = vcmask 1041409
      %vm392 = vsmask.f32 1280
      %vm393 = vmand %vm391, %vm392
      %v394 = vld [vmem:[#allocation3] sm:$0x2]
      %v395 = vsel %vm393, %v389, %v394
      %396 = vst [vmem:[#allocation3] sm:$0x2] %v395
      %v397 = vld [vmem:[#allocation2] sm:$0x3]
      %399 = vst [vmem:[#allocation1] ss:$4 sm:$0xff] %v397
      %v400 = vld [vmem:[#allocation1] sm:$0xff]
      %v401 = vshll.u32 %v400, 16
      %v403 = vrot.slane %v401, 7
      %404 = vrot.lane.b32.xlu0 %v403, 125
      %v405 = vpop.permute.xlu0 %404
      %v406 = vrot.slane %v405, 4
      %vm407 = vcmask 1022976
      %v408 = vsel %vm407, %v405, %v406
      %vm410 = vsmask.f32 7942
      %vm411 = vmand %vm391, %vm410
      %v412 = vld [vmem:[#allocation3] sm:$0x2]
      %v413 = vsel %vm411, %v408, %v412
      %414 = vst [vmem:[#allocation3] sm:$0x2] %v413
      %v415 = vld [vmem:[#allocation2] sm:$0x3]
      %s417 = scalar_lea.vmem [#allocation1], 2
      %418 = vst [vmem:[%s417] ss:$4 sm:$0xff] %v415
      %v419 = vld [vmem:[#allocation1] sm:$0xff]
      %421 = vrot.lane.b32.xlu0 %v419, 124
      %v422 = vpop.permute.xlu0 %421
      %v423 = vrot.slane %v422, 4
      %vm424 = vcmask 1014784
      %v425 = vsel %vm424, %v422, %v423
      %vm427 = vcmask 1042434
      %vm428 = vsmask.f32 2304
      %vm429 = vmand %vm427, %vm428
      %v430 = vld [vmem:[#allocation3] sm:$0x4]
      %v431 = vsel %vm429, %v425, %v430
      %432 = vst [vmem:[#allocation3] sm:$0x4] %v431
      %v433 = vld [vmem:[#allocation2] sm:$0x3]
      %435 = vst [vmem:[#allocation1] ss:$4 sm:$0xff] %v433
      %v436 = vld [vmem:[#allocation1] sm:$0xff]
      %v437 = vshll.u32 %v436, 16
      %v439 = vrot.slane %v437, 6
      %440 = vrot.lane.b32.xlu0 %v439, 123
      %v441 = vpop.permute.xlu0 %440
      %v442 = vrot.slane %v441, 4
      %vm443 = vcmask 1006592
      %v444 = vsel %vm443, %v441, %v442
      %vm446 = vsmask.f32 7946
      %vm447 = vmand %vm427, %vm446
      %v448 = vld [vmem:[#allocation3] sm:$0x4]
      %v449 = vsel %vm447, %v444, %v448
      %450 = vst [vmem:[#allocation3] sm:$0x4] %v449
      %v451 = vld [vmem:[#allocation2] sm:$0x3]
      %s453 = scalar_lea.vmem [#allocation1], 3
      %454 = vst [vmem:[%s453] ss:$4 sm:$0xff] %v451
      %v455 = vld [vmem:[#allocation1] sm:$0xff]
      %457 = vrot.lane.b32.xlu0 %v455, 122
      %v458 = vpop.permute.xlu0 %457
      %v459 = vrot.slane %v458, 4
      %vm460 = vcmask 998400
      %v461 = vsel %vm460, %v458, %v459
      %vm463 = vcmask 1043459
      %vm464 = vsmask.f32 3328
      %vm465 = vmand %vm463, %vm464
      %v466 = vld [vmem:[#allocation3] sm:$0x8]
      %v467 = vsel %vm465, %v461, %v466
      %468 = vst [vmem:[#allocation3] sm:$0x8] %v467
      %v469 = vld [vmem:[#allocation2] sm:$0x3]
      %471 = vst [vmem:[#allocation1] ss:$4 sm:$0xff] %v469
      %v472 = vld [vmem:[#allocation1] sm:$0xff]
      %v473 = vshll.u32 %v472, 16
      %v475 = vrot.slane %v473, 5
      %476 = vrot.lane.b32.xlu0 %v475, 121
      %v477 = vpop.permute.xlu0 %476
      %v478 = vrot.slane %v477, 4
      %vm479 = vcmask 990208
      %v480 = vsel %vm479, %v477, %v478
      %vm482 = vsmask.f32 7950
      %vm483 = vmand %vm463, %vm482
      %v484 = vld [vmem:[#allocation3] sm:$0x8]
      %v485 = vsel %vm483, %v480, %v484
      %486 = vst [vmem:[#allocation3] sm:$0x8] %v485
      %v487 = vld [vmem:[#allocation2] sm:$0x3]
      %489 = vst [vmem:[#allocation1] ss:$4 sm:$0xff] %v487
      %v490 = vld [vmem:[#allocation1] sm:$0xff]
      %492 = vrot.lane.b32.xlu0 %v490, 120
      %v493 = vpop.permute.xlu0 %492
      %v494 = vrot.slane %v493, 4
      %vm495 = vcmask 982016
      %v496 = vsel %vm495, %v493, %v494
      %v498 = vld [vmem:[#allocation3 + $0x4] sm:$0x1]
      %v499 = vsel %vm350, %v496, %v498
      %500 = vst [vmem:[#allocation3 + $0x4] sm:$0x1] %v499
      %v501 = vld [vmem:[#allocation2] sm:$0x3]
      %503 = vst [vmem:[#allocation1] ss:$4 sm:$0xff] %v501
      %v504 = vld [vmem:[#allocation1] sm:$0xff]
      %v505 = vshll.u32 %v504, 16
      %507 = vrot.lane.b32.xlu0 %v505, 119
      %v508 = vpop.permute.xlu0 %507
      %v509 = vrot.slane %v508, 4
      %vm510 = vcmask 973824
      %v511 = vsel %vm510, %v508, %v509
      %v513 = vld [vmem:[#allocation3 + $0x4] sm:$0x1]
      %v514 = vsel %vm375, %v511, %v513
      %515 = vst [vmem:[#allocation3 + $0x4] sm:$0x1] %v514
      %v516 = vld [vmem:[#allocation2] sm:$0x3]
      %s518 = scalar_lea.vmem [#allocation1], 1
      %519 = vst [vmem:[%s518] ss:$4 sm:$0xff] %v516
      %v520 = vld [vmem:[#allocation1] sm:$0xff]
      %522 = vrot.lane.b32.xlu0 %v520, 118
      %v523 = vpop.permute.xlu0 %522
      %v524 = vrot.slane %v523, 4
      %vm525 = vcmask 965632
      %v526 = vsel %vm525, %v523, %v524
      %v528 = vld [vmem:[#allocation3 + $0x4] sm:$0x2]
      %v529 = vsel %vm393, %v526, %v528
      %530 = vst [vmem:[#allocation3 + $0x4] sm:$0x2] %v529
      %v531 = vld [vmem:[#allocation2] sm:$0x3]
      %533 = vst [vmem:[#allocation1] ss:$4 sm:$0xff] %v531
      %v534 = vld [vmem:[#allocation1] sm:$0xff]
      %v535 = vshll.u32 %v534, 16
      %v537 = vrot.slane %v535, 7
      %538 = vrot.lane.b32.xlu0 %v537, 117
      %v539 = vpop.permute.xlu0 %538
      %v540 = vrot.slane %v539, 4
      %vm541 = vcmask 957440
      %v542 = vsel %vm541, %v539, %v540
      %v544 = vld [vmem:[#allocation3 + $0x4] sm:$0x2]
      %v545 = vsel %vm411, %v542, %v544
      %546 = vst [vmem:[#allocation3 + $0x4] sm:$0x2] %v545
      %v547 = vld [vmem:[#allocation2] sm:$0x3]
      %s549 = scalar_lea.vmem [#allocation1], 2
      %550 = vst [vmem:[%s549] ss:$4 sm:$0xff] %v547
      %v551 = vld [vmem:[#allocation1] sm:$0xff]
      %553 = vrot.lane.b32.xlu0 %v551, 116
      %v554 = vpop.permute.xlu0 %553
      %v555 = vrot.slane %v554, 4
      %vm556 = vcmask 949248
      %v557 = vsel %vm556, %v554, %v555
      %v559 = vld [vmem:[#allocation3 + $0x4] sm:$0x4]
      %v560 = vsel %vm429, %v557, %v559
      %561 = vst [vmem:[#allocation3 + $0x4] sm:$0x4] %v560
      %v562 = vld [vmem:[#allocation2] sm:$0x3]
      %564 = vst [vmem:[#allocation1] ss:$4 sm:$0xff] %v562
      %v565 = vld [vmem:[#allocation1] sm:$0xff]
      %v566 = vshll.u32 %v565, 16
      %v568 = vrot.slane %v566, 6
      %569 = vrot.lane.b32.xlu0 %v568, 115
      %v570 = vpop.permute.xlu0 %569
      %v571 = vrot.slane %v570, 4
      %vm572 = vcmask 941056
      %v573 = vsel %vm572, %v570, %v571
      %v575 = vld [vmem:[#allocation3 + $0x4] sm:$0x4]
      %v576 = vsel %vm447, %v573, %v575
      %577 = vst [vmem:[#allocation3 + $0x4] sm:$0x4] %v576
      %v578 = vld [vmem:[#allocation2] sm:$0x3]
      %s580 = scalar_lea.vmem [#allocation1], 3
      %581 = vst [vmem:[%s580] ss:$4 sm:$0xff] %v578
      %v582 = vld [vmem:[#allocation1] sm:$0xff]
      %584 = vrot.lane.b32.xlu0 %v582, 114
      %v585 = vpop.permute.xlu0 %584
      %v586 = vrot.slane %v585, 4
      %vm587 = vcmask 932864
      %v588 = vsel %vm587, %v585, %v586
      %v590 = vld [vmem:[#allocation3 + $0x4] sm:$0x8]
      %v591 = vsel %vm465, %v588, %v590
      %592 = vst [vmem:[#allocation3 + $0x4] sm:$0x8] %v591
      %v593 = vld [vmem:[%s304] sm:$0xf]
      %v594 = vld [vmem:[%s304 + $0x4] sm:$0xf]
      %v595 = vld [vmem:[%s304 + $0x8] sm:$0xf]
      %v596 = vld [vmem:[%s304 + $0xc] sm:$0xf]
      %v597 = vld [vmem:[%s304 + $0x10] sm:$0xf]
      %v598 = vld [vmem:[%s304 + $0x14] sm:$0xf]
      %v599 = vld [vmem:[%s304 + $0x18] sm:$0xf]
      %v600 = vld [vmem:[%s304 + $0x1c] sm:$0xf]
      %v601 = vld [vmem:[%s304 + $0x20] sm:$0xf]
      %v602 = vld [vmem:[%s304 + $0x24] sm:$0xf]
      %v603 = vld [vmem:[%s304 + $0x28] sm:$0xf]
      %v604 = vld [vmem:[%s304 + $0x2c] sm:$0xf]
      %v605 = vld [vmem:[%s304 + $0x30] sm:$0xf]
      %v606 = vld [vmem:[%s304 + $0x34] sm:$0xf]
      %v607 = vld [vmem:[%s304 + $0x38] sm:$0xf]
      %v608 = vld [vmem:[%s304 + $0x3c] sm:$0xf]
      %v609 = vld [vmem:[#allocation3] sm:$0xf]
      %v610 = vld [vmem:[#allocation3 + $0x4] sm:$0xf]
      %v611 = vld [vmem:[%s333] sm:$0xff]
      %v612 = vld [vmem:[%s333 + $0x8] sm:$0xff]
      %v613 = vld [vmem:[%s333 + $0x10] sm:$0xff]
      %v614 = vld [vmem:[%s333 + $0x18] sm:$0xff]
      %v615 = vld [vmem:[%s333 + $0x20] sm:$0xff]
      %v616 = vld [vmem:[%s333 + $0x28] sm:$0xff]
      %v617 = vld [vmem:[%s333 + $0x30] sm:$0xff]
      %v618 = vld [vmem:[%s333 + $0x38] sm:$0xff]
      %v619 = vld [vmem:[%s333 + $0x40] sm:$0xff]
      %v620 = vld [vmem:[%s333 + $0x48] sm:$0xff]
      %v621 = vld [vmem:[%s333 + $0x50] sm:$0xff]
      %v622 = vld [vmem:[%s333 + $0x58] sm:$0xff]
      %v623 = vld [vmem:[%s333 + $0x60] sm:$0xff]
      %v624 = vld [vmem:[%s333 + $0x68] sm:$0xff]
      %v625 = vld [vmem:[%s333 + $0x70] sm:$0xff]
      %v626 = vld [vmem:[%s333 + $0x78] sm:$0xff]
      %628 = vset.pattern.permute.xlu0 0
      %629 = vperm.xlu0 %628, %v611
      %v630 = vpop.permute.xlu0 %629
      %633 = vset.pattern.permute.xlu0 0
      %634 = vperm.xlu0 %633, %v612
      %v635 = vpop.permute.xlu0 %634
      %638 = vset.pattern.permute.xlu0 0
      %639 = vperm.xlu0 %638, %v613
      %v640 = vpop.permute.xlu0 %639
      %643 = vset.pattern.permute.xlu0 0
      %644 = vperm.xlu0 %643, %v614
      %v645 = vpop.permute.xlu0 %644
      %648 = vset.pattern.permute.xlu0 0
      %649 = vperm.xlu0 %648, %v615
      %v650 = vpop.permute.xlu0 %649
      %653 = vset.pattern.permute.xlu0 0
      %654 = vperm.xlu0 %653, %v616
      %v655 = vpop.permute.xlu0 %654
      %658 = vset.pattern.permute.xlu0 0
      %659 = vperm.xlu0 %658, %v617
      %v660 = vpop.permute.xlu0 %659
      %663 = vset.pattern.permute.xlu0 0
      %664 = vperm.xlu0 %663, %v618
      %v665 = vpop.permute.xlu0 %664
      %668 = vset.pattern.permute.xlu0 0
      %669 = vperm.xlu0 %668, %v619
      %v670 = vpop.permute.xlu0 %669
      %673 = vset.pattern.permute.xlu0 0
      %674 = vperm.xlu0 %673, %v620
      %v675 = vpop.permute.xlu0 %674
      %678 = vset.pattern.permute.xlu0 0
      %679 = vperm.xlu0 %678, %v621
      %v680 = vpop.permute.xlu0 %679
      %683 = vset.pattern.permute.xlu0 0
      %684 = vperm.xlu0 %683, %v622
      %v685 = vpop.permute.xlu0 %684
      %688 = vset.pattern.permute.xlu0 0
      %689 = vperm.xlu0 %688, %v623
      %v690 = vpop.permute.xlu0 %689
      %693 = vset.pattern.permute.xlu0 0
      %694 = vperm.xlu0 %693, %v624
      %v695 = vpop.permute.xlu0 %694
      %698 = vset.pattern.permute.xlu0 0
      %699 = vperm.xlu0 %698, %v625
      %v700 = vpop.permute.xlu0 %699
      %703 = vset.pattern.permute.xlu0 0
      %704 = vperm.xlu0 %703, %v626
      %v705 = vpop.permute.xlu0 %704
      %v723 = vunpack.c.l.b16 %v593
      %v724 = vunpack.c.l.b16 %v594
      %v725 = vunpack.c.l.b16 %v595
      %v726 = vunpack.c.l.b16 %v596
      %v727 = vunpack.c.l.b16 %v597
      %v728 = vunpack.c.l.b16 %v598
      %v729 = vunpack.c.l.b16 %v599
      %v730 = vunpack.c.l.b16 %v600
      %v731 = vunpack.c.l.b16 %v601
      %v732 = vunpack.c.l.b16 %v602
      %v733 = vunpack.c.l.b16 %v603
      %v734 = vunpack.c.l.b16 %v604
      %v735 = vunpack.c.l.b16 %v605
      %v736 = vunpack.c.l.b16 %v606
      %v737 = vunpack.c.l.b16 %v607
      %v738 = vunpack.c.l.b16 %v608
      %v739 = vpack.c.b16 %v724, %v723
      %v740 = vpack.c.b16 %v726, %v725
      %v741 = vpack.c.b16 %v728, %v727
      %v742 = vpack.c.b16 %v730, %v729
      %v743 = vpack.c.b16 %v732, %v731
      %v744 = vpack.c.b16 %v734, %v733
      %v745 = vpack.c.b16 %v736, %v735
      %v746 = vpack.c.b16 %v738, %v737
      %v749 = vunpack.c.l.b16 %v609
      %v750 = vunpack.c.l.b16 %v610
      %v751 = vpack.c.b16 %v750, %v749
      %vm752 = vcmask 121856
      %v754 = vsel %vm752, %v739, 0
      %v757 = vsel %vm752, %v740, 0
      %v760 = vsel %vm752, %v741, 0
      %v763 = vsel %vm752, %v742, 0
      %v766 = vsel %vm752, %v743, 0
      %v769 = vsel %vm752, %v744, 0
      %v772 = vsel %vm752, %v745, 0
      %v775 = vsel %vm752, %v746, 0
      %vm777 = vcmask 1046528
      %vm778 = vcmask 1047552
      %v779 = vsel %vm777, 4294967295, 65535
      %v780 = vsel %vm778, %v779, 0
      %v782 = vand.u32 %v751, %v780
      %784 = vmatpush.bf16.msra.mxu0 0
      %785 = vmatpush.bf16.msra.mxu0 0
      %786 = vmatpush.bf16.msra.mxu0 0
      %787 = vmatpush.bf16.msra.mxu0 0
      %788 = vmatpush.bf16.msra.mxu0 0
      %789 = vmatpush.bf16.msra.mxu0 0
      %790 = vmatpush.bf16.msra.mxu0 0
      %791 = vmatpush.bf16.msra.mxu0 %v782
      %792 = vmatmul.bf16.gmra.mxu0 %v754
      %v793 = vpop.f32.mrf.mxu0
      %v794 = vadd.f32 %v630, %v793
      %v795 = vpop.f32.mrf.mxu0
      %v796 = vadd.f32 %v635, %v795
      %797 = vmatmul.bf16.gmra.mxu0 %v757
      %v798 = vpop.f32.mrf.mxu0
      %v799 = vadd.f32 %v640, %v798
      %v800 = vpop.f32.mrf.mxu0
      %v801 = vadd.f32 %v645, %v800
      %802 = vmatmul.bf16.gmra.mxu0 %v760
      %v803 = vpop.f32.mrf.mxu0
      %v804 = vadd.f32 %v650, %v803
      %v805 = vpop.f32.mrf.mxu0
      %v806 = vadd.f32 %v655, %v805
      %807 = vmatmul.bf16.gmra.mxu0 %v763
      %v808 = vpop.f32.mrf.mxu0
      %v809 = vadd.f32 %v660, %v808
      %v810 = vpop.f32.mrf.mxu0
      %v811 = vadd.f32 %v665, %v810
      %812 = vmatmul.bf16.gmra.mxu0 %v766
      %v813 = vpop.f32.mrf.mxu0
      %v814 = vadd.f32 %v670, %v813
      %v815 = vpop.f32.mrf.mxu0
      %v816 = vadd.f32 %v675, %v815
      %817 = vmatmul.bf16.gmra.mxu0 %v769
      %v818 = vpop.f32.mrf.mxu0
      %v819 = vadd.f32 %v680, %v818
      %v820 = vpop.f32.mrf.mxu0
      %v821 = vadd.f32 %v685, %v820
      %822 = vmatmul.bf16.gmra.mxu0 %v772
      %v823 = vpop.f32.mrf.mxu0
      %v824 = vadd.f32 %v690, %v823
      %v825 = vpop.f32.mrf.mxu0
      %v826 = vadd.f32 %v695, %v825
      %827 = vmatmul.bf16.gmra.mxu0 %v775
      %v828 = vpop.f32.mrf.mxu0
      %v829 = vadd.f32 %v700, %v828
      %v830 = vpop.f32.mrf.mxu0
      %v831 = vadd.f32 %v705, %v830
      %832 = vdwg.mxu0
      %vm833 = vcmp.ge.f32.partialorder %v794, 0.0
      %vm834 = vcmp.ge.f32.partialorder %v796, 0.0
      %vm835 = vcmp.ge.f32.partialorder %v799, 0.0
      %vm836 = vcmp.ge.f32.partialorder %v801, 0.0
      %vm837 = vcmp.ge.f32.partialorder %v804, 0.0
      %vm838 = vcmp.ge.f32.partialorder %v806, 0.0
      %vm839 = vcmp.ge.f32.partialorder %v809, 0.0
      %vm840 = vcmp.ge.f32.partialorder %v811, 0.0
      %vm841 = vcmp.ge.f32.partialorder %v814, 0.0
      %vm842 = vcmp.ge.f32.partialorder %v816, 0.0
      %vm843 = vcmp.ge.f32.partialorder %v819, 0.0
      %vm844 = vcmp.ge.f32.partialorder %v821, 0.0
      %vm845 = vcmp.ge.f32.partialorder %v824, 0.0
      %vm846 = vcmp.ge.f32.partialorder %v826, 0.0
      %vm847 = vcmp.ge.f32.partialorder %v829, 0.0
      %vm848 = vcmp.ge.f32.partialorder %v831, 0.0
      %v849 = vmul.f32 %v794, 0.1
      %v850 = vmul.f32 %v796, 0.1
      %v851 = vmul.f32 %v799, 0.1
      %v852 = vmul.f32 %v801, 0.1
      %v853 = vmul.f32 %v804, 0.1
      %v854 = vmul.f32 %v806, 0.1
      %v855 = vmul.f32 %v809, 0.1
      %v856 = vmul.f32 %v811, 0.1
      %v857 = vmul.f32 %v814, 0.1
      %v858 = vmul.f32 %v816, 0.1
      %v859 = vmul.f32 %v819, 0.1
      %v860 = vmul.f32 %v821, 0.1
      %v861 = vmul.f32 %v824, 0.1
      %v862 = vmul.f32 %v826, 0.1
      %v863 = vmul.f32 %v829, 0.1
      %v864 = vmul.f32 %v831, 0.1
      %v865 = vsel %vm833, %v794, %v849
      %v866 = vsel %vm834, %v796, %v850
      %v867 = vsel %vm835, %v799, %v851
      %v868 = vsel %vm836, %v801, %v852
      %v869 = vsel %vm837, %v804, %v853
      %v870 = vsel %vm838, %v806, %v854
      %v871 = vsel %vm839, %v809, %v855
      %v872 = vsel %vm840, %v811, %v856
      %v873 = vsel %vm841, %v814, %v857
      %v874 = vsel %vm842, %v816, %v858
      %v875 = vsel %vm843, %v819, %v859
      %v876 = vsel %vm844, %v821, %v860
      %v877 = vsel %vm845, %v824, %v861
      %v878 = vsel %vm846, %v826, %v862
      %v879 = vsel %vm847, %v829, %v863
      %v880 = vsel %vm848, %v831, %v864
      %881 = vst [vmem:[%s345] sm:$0xff] %v865
      %882 = vst [vmem:[%s345 + $0x8] sm:$0xff] %v866
      %883 = vst [vmem:[%s345 + $0x10] sm:$0xff] %v867
      %884 = vst [vmem:[%s345 + $0x18] sm:$0xff] %v868
      %885 = vst [vmem:[%s345 + $0x20] sm:$0xff] %v869
      %886 = vst [vmem:[%s345 + $0x28] sm:$0xff] %v870
      %887 = vst [vmem:[%s345 + $0x30] sm:$0xff] %v871
      %888 = vst [vmem:[%s345 + $0x38] sm:$0xff] %v872
      %889 = vst [vmem:[%s345 + $0x40] sm:$0xff] %v873
      %890 = vst [vmem:[%s345 + $0x48] sm:$0xff] %v874
      %891 = vst [vmem:[%s345 + $0x50] sm:$0xff] %v875
      %892 = vst [vmem:[%s345 + $0x58] sm:$0xff] %v876
      %893 = vst [vmem:[%s345 + $0x60] sm:$0xff] %v877
      %894 = vst [vmem:[%s345 + $0x68] sm:$0xff] %v878
      %895 = vst [vmem:[%s345 + $0x70] sm:$0xff] %v879
      %896 = vst [vmem:[%s345 + $0x78] sm:$0xff] %v880
      %p897 = scmp.lt.s32.totalorder %s21, 1
      %s898 = scalar_select %p897, %s21, 1
      %p899 = scmp.lt.s32.totalorder %s20, 0
      %s900 = scalar_select %p899, %s20, 0
      %p901 = scmp.lt.s32.totalorder %s22, 0
      %s902 = scalar_select %p901, %s22, 0
      %s903 = smul.addr %s900, 16
      %s904 = sadd.s32 %s902, %s903
      %s905 = smul.addr %s898, 16
      %s906 = sadd.s32 %s904, %s905
      %s907 = smul.addr %s906, 8
      %s908 = scalar_lea.vmem %s4, %s907
      // Predicated region
      $region37: #{conv1d_pallas.1} parent=35 // pred_check
        %p909 = pneg %p170
      $region38: #{conv1d_pallas.1} parent=35 // pred_check_branch
        %911 = sbr.rel (%p909) target = $region40
      $region39: #{conv1d_pallas.1} parent=35 // pred_region
        _
      $region40: #{conv1d_pallas.1} parent=35 // pred_fallthru
        _
    $region36: #{conv1d_pallas.1} parent=5 // pred_fallthru
      _
    %p912 = scmp.le.s32.totalorder 2, %s10
    // Predicated region
    $region41: #{conv1d_pallas.1} parent=5 // pred_check
      %p913 = pneg %p912
    $region42: #{conv1d_pallas.1} parent=5 // pred_check_branch
      %915 = sbr.rel (%p913) target = $region44
    $region43: #{conv1d_pallas.1} parent=5 // pred_region
      %s916 = ssub.s32 %s10, 2
      // Predicated region
      $region45: #{conv1d_pallas.1} parent=43 // pred_check
        %p917 = pneg %p176
      $region46: #{conv1d_pallas.1} parent=43 // pred_check_branch
        %919 = sbr.rel (%p917) target = $region48
      $region47: #{conv1d_pallas.1} parent=43 // pred_region
        %p920 = scmp.lt.s32.totalorder %s24, 1
        %s921 = scalar_select %p920, %s24, 1
        %p922 = scmp.lt.s32.totalorder %s23, 0
        %s923 = scalar_select %p922, %s23, 0
        %p924 = scmp.lt.s32.totalorder %s25, 0
        %s925 = scalar_select %p924, %s25, 0
        %s926 = smul.addr %s923, 16
        %s927 = sadd.s32 %s925, %s926
        %s928 = smul.addr %s921, 16
        %s929 = sadd.s32 %s927, %s928
        %s930 = smul.addr %s929, 8
        %s931 = scalar_lea.vmem %s4, %s930
      $region48: #{conv1d_pallas.1} parent=43 // pred_fallthru
        _
    $region44: #{conv1d_pallas.1} parent=5 // pred_fallthru
      _
  $region6: #{conv1d_pallas.1} parent=0 // loop_footer
    %s14 = sadd.s32 1, %s10
  $region7: #{conv1d_pallas.1} parent=0 // loop_footer_branch
    %9 = sbr.rel target = $region3
  $region8: #{conv1d_pallas.1} parent=0 // loop_exit
    _

</llo_original>
